<compile_context>
chip_gen: v6e
topology: v6e:2x2x1
jax: 0.10.0
libtpu: 0.0.40
codegen_flags: <defaults>
</compile_context>

<pallas_src>
import functools
import math

import jax
import jax.numpy as jnp
from jax.experimental import pallas as pl
from jax.experimental.pallas import tpu as pltpu

TOK_BLOCK = 256          # tokens gathered per grid step (multiple of 8)
_SUBLANES = 8            # f32 sublanes per vreg -> rows per unmasked store
_TABLE_VMEM_BUDGET = 24 * 1024 * 1024   # double-buffered (vocab, d_chunk) slice
_VMEM_LIMIT = 48 * 1024 * 1024          # < 64 MiB (v7x) and < 128 MiB (v5e/v6e)


def _round_up(x, m):
    return ((x + m - 1) // m) * m


def _pick_d_chunk(vocab, d_model, itemsize):
    """Largest multiple-of-128 divisor of d_model whose double-buffered
    (vocab, d_chunk) table slice fits the VMEM budget (>=128 lanes keeps the
    output stores lane-dense). Falls back to the full feature dim when
    d_model is not a multiple of 128."""
    if d_model % 128 != 0:
        return d_model
    best = 128
    for c in range(128, d_model + 1, 128):
        if d_model % c == 0 and 2 * vocab * c * itemsize <= _TABLE_VMEM_BUDGET:
            best = c
    return best


def _embedding_kernel(ids_ref, emb_ref, out_ref, *, scale, tok_block):
    # ids_ref: SMEM (n_pad,) int32            (scalar-prefetched token ids)
    # emb_ref: VMEM (vocab, d_chunk) f32      (table slice for this d chunk)
    # out_ref: VMEM (tok_block, d_chunk) f32  (output tile for this grid step)
    tok_base = pl.program_id(1) * tok_block
    for g in range(tok_block // _SUBLANES):
        # Gather 8 rows via dynamic-slice loads, scale once, and store a
        # single full (8, d_chunk) tile -> unmasked vector stores.
        rows = [
            emb_ref[pl.ds(ids_ref[tok_base + g * _SUBLANES + t], 1), :]
            for t in range(_SUBLANES)
        ]
        tile = jnp.concatenate(rows, axis=0) * scale
        out_ref[pl.ds(g * _SUBLANES, _SUBLANES), :] = tile


def embedding_forward(x, table, tok_block=TOK_BLOCK):
    """x: (B, S) int ids; table: (vocab, d_model) f32 -> (B, S, d_model) f32."""
    B, S = x.shape
    vocab, d_model = table.shape
    scale = math.sqrt(d_model)

    n = B * S
    # Clamp the token tile to the (sublane-rounded) token count so tiny inputs
    # are not padded up to a huge tile; keep it a multiple of 8 sublanes.
    tok_block = max(_SUBLANES, min(tok_block, _round_up(n, _SUBLANES)))
    n_pad = _round_up(n, tok_block)

    d_chunk = _pick_d_chunk(vocab, d_model, table.dtype.itemsize)
    # TODO(synk): for vocabularies where even a (vocab, 128) f32 slice does not
    # fit VMEM, move the table to memory_space=pl.ANY and gather rows with
    # manually double-buffered pltpu.make_async_copy DMAs.

    ids = x.reshape(-1).astype(jnp.int32)
    if n_pad != n:
        # Tail tokens point at row 0; the extra rows are sliced off below.
        ids = jnp.concatenate([ids, jnp.zeros((n_pad - n,), jnp.int32)])
    # TODO(synk): for very large B*S, tile the ids per step instead of
    # scalar-prefetching the whole array (1-D SMEM pads to next_pow2(4N) B).

    kernel = functools.partial(_embedding_kernel, scale=scale,
                               tok_block=tok_block)

    out_flat = pl.pallas_call(
        kernel,
        out_shape=jax.ShapeDtypeStruct((n_pad, d_model), table.dtype),
        grid_spec=pltpu.PrefetchScalarGridSpec(
            num_scalar_prefetch=1,                     # token ids -> SMEM
            grid=(d_model // d_chunk, n_pad // tok_block),
            in_specs=[
                # (vocab, d_chunk) table slice; its block index depends only
                # on the OUTER d axis, so it is fetched once per d chunk and
                # reused across every token block (no per-step table re-DMA).
                pl.BlockSpec((vocab, d_chunk), lambda j, i, ids: (0, j)),
            ],
            out_specs=pl.BlockSpec((tok_block, d_chunk),
                                   lambda j, i, ids: (i, j)),
        ),
        compiler_params=pltpu.CompilerParams(
            dimension_semantics=("parallel", "parallel"),
            vmem_limit_bytes=_VMEM_LIMIT),
    )(ids, table)

    if n_pad != n:
        out_flat = out_flat[:n]
    return out_flat.reshape(B, S, d_model)


if __name__ == "__main__":
    vocab_size, d_model = 64, 128
    B, S = 2, 8

    key = jax.random.PRNGKey(0)
    k_w, k_x = jax.random.split(key)
    # deterministic synthetic "nn.Embedding" weight (N(0,1), like PyTorch init)
    table = jax.random.normal(k_w, (vocab_size, d_model), dtype=jnp.float32)
    x = jax.random.randint(k_x, (B, S), 0, vocab_size, dtype=jnp.int32)

    out = embedding_forward(x, table)
    out = jax.block_until_ready(out)

    ref = jnp.take(table, x, axis=0) * math.sqrt(d_model)
    assert out.shape == (B, S, d_model)
    assert out.dtype == jnp.float32
    assert jnp.allclose(out, ref, atol=1e-5, rtol=1e-5)

    print("KERNEL_OK")
</pallas_src>

<mosaic_0001>
module attributes {stable_mosaic.version = 11 : i64} {
  func.func @_embedding_kernel(%arg0: i32, %arg1: i32, %arg2: memref<16xi32, #tpu.memory_space<smem>>, %arg3: memref<64x128xf32, #tpu.memory_space<vmem>>, %arg4: memref<16x128xf32, #tpu.memory_space<vmem>>) attributes {dimension_semantics = [#tpu.dimension_semantics<parallel>, #tpu.dimension_semantics<parallel>], iteration_bounds = array<i64: 1, 1>, scalar_prefetch = 1 : i64, scratch_operands = 0 : i64, tpu.core_type = #tpu.core_type<tc>, window_params = [{transform_indices = @transform_0, window_bounds = array<i64: 64, 128>}, {transform_indices = @transform_1, window_bounds = array<i64: 16, 128>}]} {
    %c16_i32 = arith.constant 16 : i32
    %0 = arith.muli %arg1, %c16_i32 : i32
    %c0_i32 = arith.constant 0 : i32
    %1 = arith.addi %0, %c0_i32 : i32
    %c0_i32_0 = arith.constant 0 : i32
    %2 = arith.addi %1, %c0_i32_0 : i32
    %3 = arith.index_cast %2 : i32 to index
    %4 = memref.load %arg2[%3] : memref<16xi32, #tpu.memory_space<smem>>
    %5 = arith.index_cast %4 : i32 to index
    %c0 = arith.constant 0 : index
    %6 = vector.load %arg3[%5, %c0] : memref<64x128xf32, #tpu.memory_space<vmem>>, vector<1x128xf32>
    %c0_i32_1 = arith.constant 0 : i32
    %7 = arith.addi %0, %c0_i32_1 : i32
    %c1_i32 = arith.constant 1 : i32
    %8 = arith.addi %7, %c1_i32 : i32
    %9 = arith.index_cast %8 : i32 to index
    %10 = memref.load %arg2[%9] : memref<16xi32, #tpu.memory_space<smem>>
    %11 = arith.index_cast %10 : i32 to index
    %c0_2 = arith.constant 0 : index
    %12 = vector.load %arg3[%11, %c0_2] : memref<64x128xf32, #tpu.memory_space<vmem>>, vector<1x128xf32>
    %c0_i32_3 = arith.constant 0 : i32
    %13 = arith.addi %0, %c0_i32_3 : i32
    %c2_i32 = arith.constant 2 : i32
    %14 = arith.addi %13, %c2_i32 : i32
    %15 = arith.index_cast %14 : i32 to index
    %16 = memref.load %arg2[%15] : memref<16xi32, #tpu.memory_space<smem>>
    %17 = arith.index_cast %16 : i32 to index
    %c0_4 = arith.constant 0 : index
    %18 = vector.load %arg3[%17, %c0_4] : memref<64x128xf32, #tpu.memory_space<vmem>>, vector<1x128xf32>
    %c0_i32_5 = arith.constant 0 : i32
    %19 = arith.addi %0, %c0_i32_5 : i32
    %c3_i32 = arith.constant 3 : i32
    %20 = arith.addi %19, %c3_i32 : i32
    %21 = arith.index_cast %20 : i32 to index
    %22 = memref.load %arg2[%21] : memref<16xi32, #tpu.memory_space<smem>>
    %23 = arith.index_cast %22 : i32 to index
    %c0_6 = arith.constant 0 : index
    %24 = vector.load %arg3[%23, %c0_6] : memref<64x128xf32, #tpu.memory_space<vmem>>, vector<1x128xf32>
    %c0_i32_7 = arith.constant 0 : i32
    %25 = arith.addi %0, %c0_i32_7 : i32
    %c4_i32 = arith.constant 4 : i32
    %26 = arith.addi %25, %c4_i32 : i32
    %27 = arith.index_cast %26 : i32 to index
    %28 = memref.load %arg2[%27] : memref<16xi32, #tpu.memory_space<smem>>
    %29 = arith.index_cast %28 : i32 to index
    %c0_8 = arith.constant 0 : index
    %30 = vector.load %arg3[%29, %c0_8] : memref<64x128xf32, #tpu.memory_space<vmem>>, vector<1x128xf32>
    %c0_i32_9 = arith.constant 0 : i32
    %31 = arith.addi %0, %c0_i32_9 : i32
    %c5_i32 = arith.constant 5 : i32
    %32 = arith.addi %31, %c5_i32 : i32
    %33 = arith.index_cast %32 : i32 to index
    %34 = memref.load %arg2[%33] : memref<16xi32, #tpu.memory_space<smem>>
    %35 = arith.index_cast %34 : i32 to index
    %c0_10 = arith.constant 0 : index
    %36 = vector.load %arg3[%35, %c0_10] : memref<64x128xf32, #tpu.memory_space<vmem>>, vector<1x128xf32>
    %c0_i32_11 = arith.constant 0 : i32
    %37 = arith.addi %0, %c0_i32_11 : i32
    %c6_i32 = arith.constant 6 : i32
    %38 = arith.addi %37, %c6_i32 : i32
    %39 = arith.index_cast %38 : i32 to index
    %40 = memref.load %arg2[%39] : memref<16xi32, #tpu.memory_space<smem>>
    %41 = arith.index_cast %40 : i32 to index
    %c0_12 = arith.constant 0 : index
    %42 = vector.load %arg3[%41, %c0_12] : memref<64x128xf32, #tpu.memory_space<vmem>>, vector<1x128xf32>
    %c0_i32_13 = arith.constant 0 : i32
    %43 = arith.addi %0, %c0_i32_13 : i32
    %c7_i32 = arith.constant 7 : i32
    %44 = arith.addi %43, %c7_i32 : i32
    %45 = arith.index_cast %44 : i32 to index
    %46 = memref.load %arg2[%45] : memref<16xi32, #tpu.memory_space<smem>>
    %47 = arith.index_cast %46 : i32 to index
    %c0_14 = arith.constant 0 : index
    %48 = vector.load %arg3[%47, %c0_14] : memref<64x128xf32, #tpu.memory_space<vmem>>, vector<1x128xf32>
    %49 = tpu.concatenate %6, %12, %18, %24, %30, %36, %42, %48 in 0 : vector<1x128xf32>, vector<1x128xf32>, vector<1x128xf32>, vector<1x128xf32>, vector<1x128xf32>, vector<1x128xf32>, vector<1x128xf32>, vector<1x128xf32> -> vector<8x128xf32>
    %cst = arith.constant 11.3137083 : f32
    %50 = vector.broadcast %cst : f32 to vector<8x128xf32>
    %51 = arith.mulf %49, %50 : vector<8x128xf32>
    %c0_15 = arith.constant 0 : index
    %c0_16 = arith.constant 0 : index
    %52 = vector.load %arg4[%c0_15, %c0_16] : memref<16x128xf32, #tpu.memory_space<vmem>>, vector<8x128xf32>
    tpu.vector_store %arg4[%c0_15, %c0_16], %51 {strides = array<i32>} : memref<16x128xf32, #tpu.memory_space<vmem>>, vector<8x128xf32>,
    %c8_i32 = arith.constant 8 : i32
    %53 = arith.addi %0, %c8_i32 : i32
    %c0_i32_17 = arith.constant 0 : i32
    %54 = arith.addi %53, %c0_i32_17 : i32
    %55 = arith.index_cast %54 : i32 to index
    %56 = memref.load %arg2[%55] : memref<16xi32, #tpu.memory_space<smem>>
    %57 = arith.index_cast %56 : i32 to index
    %c0_18 = arith.constant 0 : index
    %58 = vector.load %arg3[%57, %c0_18] : memref<64x128xf32, #tpu.memory_space<vmem>>, vector<1x128xf32>
    %c8_i32_19 = arith.constant 8 : i32
    %59 = arith.addi %0, %c8_i32_19 : i32
    %c1_i32_20 = arith.constant 1 : i32
    %60 = arith.addi %59, %c1_i32_20 : i32
    %61 = arith.index_cast %60 : i32 to index
    %62 = memref.load %arg2[%61] : memref<16xi32, #tpu.memory_space<smem>>
    %63 = arith.index_cast %62 : i32 to index
    %c0_21 = arith.constant 0 : index
    %64 = vector.load %arg3[%63, %c0_21] : memref<64x128xf32, #tpu.memory_space<vmem>>, vector<1x128xf32>
    %c8_i32_22 = arith.constant 8 : i32
    %65 = arith.addi %0, %c8_i32_22 : i32
    %c2_i32_23 = arith.constant 2 : i32
    %66 = arith.addi %65, %c2_i32_23 : i32
    %67 = arith.index_cast %66 : i32 to index
    %68 = memref.load %arg2[%67] : memref<16xi32, #tpu.memory_space<smem>>
    %69 = arith.index_cast %68 : i32 to index
    %c0_24 = arith.constant 0 : index
    %70 = vector.load %arg3[%69, %c0_24] : memref<64x128xf32, #tpu.memory_space<vmem>>, vector<1x128xf32>
    %c8_i32_25 = arith.constant 8 : i32
    %71 = arith.addi %0, %c8_i32_25 : i32
    %c3_i32_26 = arith.constant 3 : i32
    %72 = arith.addi %71, %c3_i32_26 : i32
    %73 = arith.index_cast %72 : i32 to index
    %74 = memref.load %arg2[%73] : memref<16xi32, #tpu.memory_space<smem>>
    %75 = arith.index_cast %74 : i32 to index
    %c0_27 = arith.constant 0 : index
    %76 = vector.load %arg3[%75, %c0_27] : memref<64x128xf32, #tpu.memory_space<vmem>>, vector<1x128xf32>
    %c8_i32_28 = arith.constant 8 : i32
    %77 = arith.addi %0, %c8_i32_28 : i32
    %c4_i32_29 = arith.constant 4 : i32
    %78 = arith.addi %77, %c4_i32_29 : i32
    %79 = arith.index_cast %78 : i32 to index
    %80 = memref.load %arg2[%79] : memref<16xi32, #tpu.memory_space<smem>>
    %81 = arith.index_cast %80 : i32 to index
    %c0_30 = arith.constant 0 : index
    %82 = vector.load %arg3[%81, %c0_30] : memref<64x128xf32, #tpu.memory_space<vmem>>, vector<1x128xf32>
    %c8_i32_31 = arith.constant 8 : i32
    %83 = arith.addi %0, %c8_i32_31 : i32
    %c5_i32_32 = arith.constant 5 : i32
    %84 = arith.addi %83, %c5_i32_32 : i32
    %85 = arith.index_cast %84 : i32 to index
    %86 = memref.load %arg2[%85] : memref<16xi32, #tpu.memory_space<smem>>
    %87 = arith.index_cast %86 : i32 to index
    %c0_33 = arith.constant 0 : index
    %88 = vector.load %arg3[%87, %c0_33] : memref<64x128xf32, #tpu.memory_space<vmem>>, vector<1x128xf32>
    %c8_i32_34 = arith.constant 8 : i32
    %89 = arith.addi %0, %c8_i32_34 : i32
    %c6_i32_35 = arith.constant 6 : i32
    %90 = arith.addi %89, %c6_i32_35 : i32
    %91 = arith.index_cast %90 : i32 to index
    %92 = memref.load %arg2[%91] : memref<16xi32, #tpu.memory_space<smem>>
    %93 = arith.index_cast %92 : i32 to index
    %c0_36 = arith.constant 0 : index
    %94 = vector.load %arg3[%93, %c0_36] : memref<64x128xf32, #tpu.memory_space<vmem>>, vector<1x128xf32>
    %c8_i32_37 = arith.constant 8 : i32
    %95 = arith.addi %0, %c8_i32_37 : i32
    %c7_i32_38 = arith.constant 7 : i32
    %96 = arith.addi %95, %c7_i32_38 : i32
    %97 = arith.index_cast %96 : i32 to index
    %98 = memref.load %arg2[%97] : memref<16xi32, #tpu.memory_space<smem>>
    %99 = arith.index_cast %98 : i32 to index
    %c0_39 = arith.constant 0 : index
    %100 = vector.load %arg3[%99, %c0_39] : memref<64x128xf32, #tpu.memory_space<vmem>>, vector<1x128xf32>
    %101 = tpu.concatenate %58, %64, %70, %76, %82, %88, %94, %100 in 0 : vector<1x128xf32>, vector<1x128xf32>, vector<1x128xf32>, vector<1x128xf32>, vector<1x128xf32>, vector<1x128xf32>, vector<1x128xf32>, vector<1x128xf32> -> vector<8x128xf32>
    %cst_40 = arith.constant 11.3137083 : f32
    %102 = vector.broadcast %cst_40 : f32 to vector<8x128xf32>
    %103 = arith.mulf %101, %102 : vector<8x128xf32>
    %c8 = arith.constant 8 : index
    %c0_41 = arith.constant 0 : index
    %104 = vector.load %arg4[%c8, %c0_41] : memref<16x128xf32, #tpu.memory_space<vmem>>, vector<8x128xf32>
    tpu.vector_store %arg4[%c8, %c0_41], %103 {strides = array<i32>} : memref<16x128xf32, #tpu.memory_space<vmem>>, vector<8x128xf32>,
    return
  }
  func.func @transform_0(%arg0: i32, %arg1: i32, %arg2: memref<16xi32, #tpu.memory_space<smem>>) -> (i32, i32) {
    %c0_i32 = arith.constant 0 : i32
    %c0_i32_0 = arith.constant 0 : i32
    return %c0_i32, %arg0 : i32, i32
  }
  func.func @transform_1(%arg0: i32, %arg1: i32, %arg2: memref<16xi32, #tpu.memory_space<smem>>) -> (i32, i32) {
    %c0_i32 = arith.constant 0 : i32
    return %arg1, %arg0 : i32, i32
  }
}

</mosaic_0001>

<llo_original>
// kernel: tpu_custom_call.1
$region0: #{tpu_custom_call.1}
  #allocation0 [shape = 'u32[]', space=smem, size = 0x4, offset = 0x4, fixed_abs, tag = 'smem constant byte address 0x4 - core index']
  #allocation1 [shape = 'u32[144,128]{1,0:T(1,128)}', space=vmem, size = 0x12000, scoped, tag = 'internal scratch']
  #allocation2 [shape = 's32[1]{0}', space=sflag, size = 0x4, scoped, tag = 'scoped memory for tpu_custom_call.1']
  #allocation3 [shape = 'u8[512]{0}', space=smem, size = 0x200, scoped, tag = 'prefetched SMEM operand 0']
  %s0 = inlined_call_operand.hbm [shape: s32[16], index: 0, kind: input, shape index: {}]
  %s1 = inlined_call_operand.hbm [shape: f32[64,128], index: 1, kind: input, shape index: {}]
  %s2 = inlined_call_operand.hbm [shape: f32[16,128], index: 2, kind: output, shape index: {}]
  %s3 = sld [smem:[#allocation0]]
  $region18: #{tpu_custom_call.1} parent=0
    _
  %s5 = ssub.s32 1, %s3
  %s6 = scalar_select 0, %s5, %s3
  %8 = dma.hbm_to_smem %s0, 16, [#allocation3], [#allocation2]
  %9 = dma.done [#allocation2], 16
  %10 = sfence
  $region1: #{tpu_custom_call.1} parent=0
    #allocation4 [shape = 'u8[32768]{0}', space=vmem, size = 0x8000, scoped, tag = 'input window, operand 1, single buffered']
    #allocation5 [shape = 's32[1]{0}', space=sflag, size = 0x4, scoped, tag = 'scoped memory for tpu_custom_call.1']
    #allocation6 [shape = 's32[1]{0}', space=sflag, size = 0x4, scoped, tag = 'scoped memory for tpu_custom_call.1']
    #allocation7 [shape = 'u8[8192]{0}', space=vmem, size = 0x2000, scoped, tag = 'output window, operand 0, single buffered']
    %11 = vsyncpa [#allocation5], 0
    %12 = vsyncpa [#allocation6], 0
    // Predicated region
    $region2: #{tpu_custom_call.1} parent=1 // pred_check
      _
    $region3: #{tpu_custom_call.1} parent=1 // pred_check_branch
      %14 = sbr.rel (0) target = $region5
    $region4: #{tpu_custom_call.1} parent=1 // pred_region
      %s16 = ssub.s32 1024, 1024
      %17 = vsyncadd [#allocation5], %s16
      %s18 = sshll.u32 [#allocation4], 4
      %s19 = int_to_ptr.vmem [resolvable:$true] %s18
      %24 = dma.hbm_to_vmem [thread:$0]  %s1, 1024, %s19, [#allocation5], 128, 128, 8
    $region5: #{tpu_custom_call.1} parent=1 // pred_fallthru
      _
    // Predicated region
    $region6: #{tpu_custom_call.1} parent=1 // pred_check
      _
    $region7: #{tpu_custom_call.1} parent=1 // pred_check_branch
      %26 = sbr.rel (0) target = $region9
    $region8: #{tpu_custom_call.1} parent=1 // pred_region
      %27 = dma.done [#allocation5], 1024
    $region9: #{tpu_custom_call.1} parent=1 // pred_fallthru
      _
    %s28 = smul.u32 0, 16
    %s29 = sld [smem:[#allocation3 + %s28]]
    %s30 = scalar_lea.vmem [#allocation4], %s29
    %v31 = vld [vmem:[%s30] sm:$0x1]
    %s32 = sadd.s32 %s28, 1
    %s33 = sld [smem:[#allocation3 + %s32]]
    %s34 = scalar_lea.vmem [#allocation4], %s33
    %v35 = vld [vmem:[%s34] sm:$0x1]
    %s36 = sadd.s32 %s28, 2
    %s37 = sld [smem:[#allocation3 + %s36]]
    %s38 = scalar_lea.vmem [#allocation4], %s37
    %v39 = vld [vmem:[%s38] sm:$0x1]
    %s40 = sadd.s32 %s28, 3
    %s41 = sld [smem:[#allocation3 + %s40]]
    %s42 = scalar_lea.vmem [#allocation4], %s41
    %v43 = vld [vmem:[%s42] sm:$0x1]
    %s44 = sadd.s32 %s28, 4
    %s45 = sld [smem:[#allocation3 + %s44]]
    %s46 = scalar_lea.vmem [#allocation4], %s45
    %v47 = vld [vmem:[%s46] sm:$0x1]
    %s48 = sadd.s32 %s28, 5
    %s49 = sld [smem:[#allocation3 + %s48]]
    %s50 = scalar_lea.vmem [#allocation4], %s49
    %v51 = vld [vmem:[%s50] sm:$0x1]
    %s52 = sadd.s32 %s28, 6
    %s53 = sld [smem:[#allocation3 + %s52]]
    %s54 = scalar_lea.vmem [#allocation4], %s53
    %v55 = vld [vmem:[%s54] sm:$0x1]
    %s56 = sadd.s32 %s28, 7
    %s57 = sld [smem:[#allocation3 + %s56]]
    %s58 = scalar_lea.vmem [#allocation4], %s57
    %v59 = vld [vmem:[%s58] sm:$0x1]
    %v61 = vrot.slane %v35, 7
    %v64 = vrot.slane %v39, 6
    %v67 = vrot.slane %v43, 5
    %v70 = vrot.slane %v47, 4
    %v73 = vrot.slane %v51, 3
    %v76 = vrot.slane %v55, 2
    %v79 = vrot.slane %v59, 1
    %vm81 = vcmask 1040384
    %v82 = vsel %vm81, %v31, %v61
    %vm83 = vcmask 1041408
    %v84 = vsel %vm83, %v82, %v64
    %vm85 = vcmask 1042432
    %v86 = vsel %vm85, %v84, %v67
    %vm87 = vcmask 1043456
    %v88 = vsel %vm87, %v86, %v70
    %vm89 = vcmask 1044480
    %v90 = vsel %vm89, %v88, %v73
    %vm91 = vcmask 1045504
    %v92 = vsel %vm91, %v90, %v76
    %vm93 = vcmask 1046528
    %v94 = vsel %vm93, %v92, %v79
    %v95 = vmul.f32 %v94, 11.313708
    %96 = vst [vmem:[#allocation7] sm:$0xff] %v95
    %s97 = sadd.s32 %s28, 8
    %s98 = sld [smem:[#allocation3 + %s97]]
    %s99 = scalar_lea.vmem [#allocation4], %s98
    %v100 = vld [vmem:[%s99] sm:$0x1]
    %s101 = sadd.s32 %s28, 9
    %s102 = sld [smem:[#allocation3 + %s101]]
    %s103 = scalar_lea.vmem [#allocation4], %s102
    %v104 = vld [vmem:[%s103] sm:$0x1]
    %s105 = sadd.s32 %s28, 10
    %s106 = sld [smem:[#allocation3 + %s105]]
    %s107 = scalar_lea.vmem [#allocation4], %s106
    %v108 = vld [vmem:[%s107] sm:$0x1]
    %s109 = sadd.s32 %s28, 11
    %s110 = sld [smem:[#allocation3 + %s109]]
    %s111 = scalar_lea.vmem [#allocation4], %s110
    %v112 = vld [vmem:[%s111] sm:$0x1]
    %s113 = sadd.s32 %s28, 12
    %s114 = sld [smem:[#allocation3 + %s113]]
    %s115 = scalar_lea.vmem [#allocation4], %s114
    %v116 = vld [vmem:[%s115] sm:$0x1]
    %s117 = sadd.s32 %s28, 13
    %s118 = sld [smem:[#allocation3 + %s117]]
    %s119 = scalar_lea.vmem [#allocation4], %s118
    %v120 = vld [vmem:[%s119] sm:$0x1]
    %s121 = sadd.s32 %s28, 14
    %s122 = sld [smem:[#allocation3 + %s121]]
    %s123 = scalar_lea.vmem [#allocation4], %s122
    %v124 = vld [vmem:[%s123] sm:$0x1]
    %s125 = sadd.s32 %s28, 15
    %s126 = sld [smem:[#allocation3 + %s125]]
    %s127 = scalar_lea.vmem [#allocation4], %s126
    %v128 = vld [vmem:[%s127] sm:$0x1]
    %v130 = vrot.slane %v104, 7
    %v133 = vrot.slane %v108, 6
    %v136 = vrot.slane %v112, 5
    %v139 = vrot.slane %v116, 4
    %v142 = vrot.slane %v120, 3
    %v145 = vrot.slane %v124, 2
    %v148 = vrot.slane %v128, 1
    %v150 = vsel %vm81, %v100, %v130
    %v151 = vsel %vm83, %v150, %v133
    %v152 = vsel %vm85, %v151, %v136
    %v153 = vsel %vm87, %v152, %v139
    %v154 = vsel %vm89, %v153, %v142
    %v155 = vsel %vm91, %v154, %v145
    %v156 = vsel %vm93, %v155, %v148
    %v157 = vmul.f32 %v156, 11.313708
    %158 = vst [vmem:[#allocation7 + $0x8] sm:$0xff] %v157
    // Predicated region
    $region10: #{tpu_custom_call.1} parent=1 // pred_check
      _
    $region11: #{tpu_custom_call.1} parent=1 // pred_check_branch
      %160 = sbr.rel (0) target = $region13
    $region12: #{tpu_custom_call.1} parent=1 // pred_region
      %s162 = ssub.s32 256, 256
      %163 = vsyncadd [#allocation6], %s162
      %s164 = sshll.u32 [#allocation7], 4
      %s165 = int_to_ptr.vmem [resolvable:$true] %s164
      %170 = dma.vmem_to_hbm [thread:$0]  %s165, 256, %s2, [#allocation6], 128, 128, 8
    $region13: #{tpu_custom_call.1} parent=1 // pred_fallthru
      _
    // Predicated region
    $region14: #{tpu_custom_call.1} parent=1 // pred_check
      _
    $region15: #{tpu_custom_call.1} parent=1 // pred_check_branch
      %172 = sbr.rel (0) target = $region17
    $region16: #{tpu_custom_call.1} parent=1 // pred_region
      %173 = dma.done [#allocation6], 256
    $region17: #{tpu_custom_call.1} parent=1 // pred_fallthru
      _
    %174 = vsyncpa [#allocation5], 1
    %175 = vsyncpa [#allocation6], 1

</llo_original>
